<compile_context>
chip_gen: v7x
topology: tpu7x:2x2x1
jax: 0.10.0
libtpu: 0.0.40
codegen_flags: <defaults>
</compile_context>

<pallas_src>
import numpy as np
import jax
import jax.numpy as jnp
from jax.experimental import pallas as pl
from jax.experimental.pallas import tpu as pltpu

# ----------------------------- layout constants -----------------------------
H = W = 16            # model input/output spatial size
CP = 32               # channels padded 30 -> 32 (sublane friendly)
WC = 18               # canvas row pitch (holds every intermediate size <= 16(+2))
PC = WC * WC          # 324 flattened canvas positions per sample
SEG = 384             # per-sample lane segment: [0,324) data | [324,384) zeros
KSPAN = 2 * WC + 2    # 38: max flat offset of a 3x3 tap
NC3 = 9               # number of 3x3 (de)conv layers (3 enc + 6 dec)
NB = 3                # number of 1x1 bottleneck layers
NBIAS = 12            # total bias vectors


def _mask_idx(size):
    # valid output sizes are 4,6,...,16 -> mask rows 0..6
    return (size - 4) // 2


# -------------------- pltpu.roll direction probe (one-time) ------------------
# The kernel only needs a fixed static lane rotation per tap; to be robust we
# probe the hardware roll direction once (outside jit) and bake the sign in.
_ROLL_NP_LIKE = None   # True  => pltpu.roll(x, s)[i] == x[(i - s) % n]  (np.roll)


def _detect_roll_direction():
    global _ROLL_NP_LIKE
    if _ROLL_NP_LIKE is not None:
        return _ROLL_NP_LIKE

    def probe(x_ref, o_ref):
        o_ref[...] = pltpu.roll(x_ref[...], 1, axis=1)

    x = jnp.asarray(np.tile(np.arange(128, dtype=np.float32), (8, 1)))
    out = pl.pallas_call(
        probe, out_shape=jax.ShapeDtypeStruct((8, 128), jnp.float32))(x)
    v = float(jax.device_get(out)[0, 0])
    if v == 127.0:
        _ROLL_NP_LIKE = True
    elif v == 1.0:
        _ROLL_NP_LIKE = False
    else:
        raise RuntimeError(f"unexpected pltpu.roll semantics (probe value {v})")
    return _ROLL_NP_LIKE


# --------------------------------- kernel -----------------------------------
def _ddae_kernel(x_ref, wc3_ref, wb_ref, bias_ref, mask_ref, out_ref, act0, act1):
    nlanes = act0.shape[1]

    def shifted(a, d):
        # Returns view with result[p] = a[(p - d) % nlanes]  (np.roll(a, d) semantics).
        d = d % nlanes
        if d == 0:
            return a
        sh = d if _ROLL_NP_LIKE else (nlanes - d)
        return pltpu.roll(a, sh, axis=1)

    def conv3x3(src_ref, dst_ref, wi, bi, back, mi):
        # out[p] = sum_taps W_k @ a[p + tap - back]; back=0 -> conv, back=KSPAN -> convT.
        a = src_ref[...]
        acc = bias_ref[bi]                       # pre-broadcast bias as accumulator seed
        for dy in range(3):
            for dx in range(3):
                k = dy * 3 + dx
                a_k = shifted(a, back - (dy * WC + dx))
                acc = acc + jnp.dot(wc3_ref[wi * 9 + k], a_k,
                                    preferred_element_type=jnp.float32)
        res = jnp.maximum(acc, 0.0) * mask_ref[mi:mi + 1, :]      # ReLU + 0/1 mask mul
        if dst_ref is None:
            out_ref[...] = res[0:1, :]           # final layer: only channel 0 is real
        else:
            dst_ref[...] = res

    def maxpool3x3(src_ref, dst_ref, mi):
        a = src_ref[...]
        out = a
        for dy in range(3):
            for dx in range(3):
                if dy == 0 and dx == 0:
                    continue
                out = jnp.maximum(out, shifted(a, -(dy * WC + dx)))
        dst_ref[...] = out * mask_ref[mi:mi + 1, :]

    def conv1x1(src_ref, dst_ref, wi, bi, mi):
        acc = bias_ref[bi] + jnp.dot(wb_ref[wi], src_ref[...],
                                     preferred_element_type=jnp.float32)
        dst_ref[...] = jnp.maximum(acc, 0.0) * mask_ref[mi:mi + 1, :]

    # ----- Encoder: (conv3x3 + relu) -> maxpool3x3, three times -----
    conv3x3(x_ref, act0, 0, 0, 0, _mask_idx(14))
    maxpool3x3(act0, act1, _mask_idx(12))
    conv3x3(act1, act0, 1, 1, 0, _mask_idx(10))
    maxpool3x3(act0, act1, _mask_idx(8))
    conv3x3(act1, act0, 2, 2, 0, _mask_idx(6))
    maxpool3x3(act0, act1, _mask_idx(4))
    # ----- Bottleneck: 3x (1x1 conv + relu) -----
    conv1x1(act1, act0, 0, 3, _mask_idx(4))
    conv1x1(act0, act1, 1, 4, _mask_idx(4))
    conv1x1(act1, act0, 2, 5, _mask_idx(4))
    # ----- Decoder: 6x (ConvTranspose2d(k=3,s=1) + relu) == flipped conv, base -KSPAN
    conv3x3(act0, act1, 3, 6, KSPAN, _mask_idx(6))
    conv3x3(act1, act0, 4, 7, KSPAN, _mask_idx(8))
    conv3x3(act0, act1, 5, 8, KSPAN, _mask_idx(10))
    conv3x3(act1, act0, 6, 9, KSPAN, _mask_idx(12))
    conv3x3(act0, act1, 7, 10, KSPAN, _mask_idx(14))
    conv3x3(act1, None, 8, 11, KSPAN, _mask_idx(16))     # writes out_ref directly


def _ddae_pallas(x_canvas, wc3, wb, bias, masks):
    assert _ROLL_NP_LIKE is not None, "call prepare_params() before the forward pass"
    _, nlanes = x_canvas.shape
    return pl.pallas_call(
        _ddae_kernel,
        out_shape=jax.ShapeDtypeStruct((1, nlanes), jnp.float32),
        grid_spec=pltpu.PrefetchScalarGridSpec(
            num_scalar_prefetch=0,
            grid=(1,),                                   # whole net = one grid step
            in_specs=[
                pl.BlockSpec((CP, nlanes), lambda i: (0, 0)),            # input canvas
                pl.BlockSpec((NC3 * 9, CP, CP), lambda i: (0, 0, 0)),    # 3x3 tap weights
                pl.BlockSpec((NB, CP, CP), lambda i: (0, 0, 0)),         # 1x1 weights
                pl.BlockSpec((NBIAS, CP, nlanes), lambda i: (0, 0, 0)),  # broadcast biases
                pl.BlockSpec((7, nlanes), lambda i: (0, 0)),             # 0/1 valid masks
            ],
            out_specs=pl.BlockSpec((1, nlanes), lambda i: (0, 0)),       # lane-dense out
            scratch_shapes=[pltpu.VMEM((CP, nlanes), jnp.float32),       # canvas A
                            pltpu.VMEM((CP, nlanes), jnp.float32)],      # canvas B
        ),
        compiler_params=pltpu.CompilerParams(
            dimension_semantics=("arbitrary",),
        ),
    )(x_canvas, wc3, wb, bias, masks)


# ------------------------------ forward wrapper ------------------------------
@jax.jit
def ddae_forward(x_nchw, kparams):
    n = x_nchw.shape[0]
    xs = x_nchw[:, 0].astype(jnp.float32)                       # (N,16,16), Cin == 1
    xs = jnp.pad(xs, ((0, 0), (0, WC - H), (0, WC - W)))        # (N,18,18)
    xs = xs.reshape(n, PC)
    xs = jnp.pad(xs, ((0, 0), (0, SEG - PC))).reshape(1, n * SEG)
    x_canvas = jnp.pad(xs, ((0, CP - 1), (0, 0)))               # (32, N*384), ch0 = data
    out = _ddae_pallas(x_canvas, kparams["wc3"], kparams["wb"],
                       kparams["bias"], kparams["masks"])       # (1, N*384)
    y = out.reshape(n, SEG)[:, :PC].reshape(n, WC, WC)[:, :H, :W]
    return y[:, None, :, :]                                     # (N,1,16,16) NCHW


# ----------------------- parameter init & kernel packing ---------------------
def init_params(key):
    """Parameters in PyTorch layouts (Conv2d: (Co,Ci,k,k); ConvT: (Ci,Co,k,k))."""
    keys = iter(jax.random.split(key, 24))

    def w(shape, fan_in):
        return jax.random.normal(next(keys), shape, jnp.float32) / jnp.sqrt(float(fan_in))

    def b(n):
        return 0.01 * jax.random.normal(next(keys), (n,), jnp.float32)

    p = {}
    p["enc1_w"], p["enc1_b"] = w((30, 1, 3, 3), 9), b(30)
    p["enc2_w"], p["enc2_b"] = w((30, 30, 3, 3), 270), b(30)
    p["enc3_w"], p["enc3_b"] = w((30, 30, 3, 3), 270), b(30)
    for i in (1, 2, 3):
        p[f"btl{i}_w"], p[f"btl{i}_b"] = w((30, 30, 1, 1), 30), b(30)
    for i in range(1, 6):
        p[f"dec{i}_w"], p[f"dec{i}_b"] = w((30, 30, 3, 3), 270), b(30)
    p["dec6_w"], p["dec6_b"] = w((30, 1, 3, 3), 270), b(1)
    return p


def _pack_conv_taps(w):     # Conv2d weight (Co,Ci,3,3) -> (9, 32, 32) per-tap matrices
    co, ci = w.shape[0], w.shape[1]
    wp = jnp.zeros((3, 3, CP, CP), jnp.float32)
    wp = wp.at[:, :, :co, :ci].set(jnp.transpose(w, (2, 3, 0, 1)))
    return wp.reshape(9, CP, CP)


def _pack_deconv_taps(wt):  # ConvTranspose2d weight (Ci,Co,3,3) -> flipped-conv taps
    w_eq = jnp.transpose(jnp.flip(wt, axis=(2, 3)), (1, 0, 2, 3))   # (Co,Ci,3,3)
    return _pack_conv_taps(w_eq)


def _pack_1x1(w):           # Conv2d 1x1 weight (Co,Ci,1,1) -> (32,32)
    w2 = w[:, :, 0, 0]
    return jnp.zeros((CP, CP), jnp.float32).at[:w2.shape[0], :w2.shape[1]].set(w2)


def _pack_bias(v, nlanes):  # bias (C,) -> pre-broadcast (32, nlanes)
    b = jnp.zeros((CP,), jnp.float32).at[:v.shape[0]].set(v)
    return jnp.broadcast_to(b[:, None], (CP, nlanes))


def _build_masks(batch):    # (7, batch*384) 0/1 masks; tail [324,384) always zero
    rows = []
    for s in range(4, 18, 2):
        m = np.zeros((WC, WC), np.float32)
        m[:s, :s] = 1.0
        seg = np.concatenate([m.reshape(-1), np.zeros(SEG - PC, np.float32)])
        rows.append(np.tile(seg, batch))
    return jnp.asarray(np.stack(rows))


def prepare_params(p, batch):
    """One-time transform into the packed layouts the kernel consumes."""
    _detect_roll_direction()
    nlanes = batch * SEG
    wc3 = jnp.concatenate(
        [_pack_conv_taps(p["enc1_w"]), _pack_conv_taps(p["enc2_w"]),
         _pack_conv_taps(p["enc3_w"])]
        + [_pack_deconv_taps(p[f"dec{i}_w"]) for i in range(1, 7)],
        axis=0)                                                        # (81,32,32)
    wb = jnp.stack([_pack_1x1(p[f"btl{i}_w"]) for i in (1, 2, 3)])     # (3,32,32)
    bias_vecs = ([p["enc1_b"], p["enc2_b"], p["enc3_b"],
                  p["btl1_b"], p["btl2_b"], p["btl3_b"]]
                 + [p[f"dec{i}_b"] for i in range(1, 7)])
    bias = jnp.stack([_pack_bias(v, nlanes) for v in bias_vecs])       # (12,32,nlanes)
    return {"wc3": wc3, "wb": wb, "bias": bias, "masks": _build_masks(batch)}


# ------------------------------ pure-JAX reference ---------------------------
def _ref_forward(x, p):
    prec = jax.lax.Precision.HIGHEST

    def conv(x, w, b):
        hh, ww = x.shape[2], x.shape[3]
        ho, wo = hh - 2, ww - 2
        out = jnp.zeros((x.shape[0], w.shape[0], ho, wo), jnp.float32)
        for dy in range(3):
            for dx in range(3):
                out = out + jnp.einsum("nchw,oc->nohw",
                                       x[:, :, dy:dy + ho, dx:dx + wo],
                                       w[:, :, dy, dx], precision=prec)
        return out + b[None, :, None, None]

    def conv_t(x, wt, b):
        n, ci, hh, ww = x.shape
        co = wt.shape[1]
        out = jnp.zeros((n, co, hh + 2, ww + 2), jnp.float32)
        for dy in range(3):
            for dx in range(3):
                out = out.at[:, :, dy:dy + hh, dx:dx + ww].add(
                    jnp.einsum("nchw,co->nohw", x, wt[:, :, dy, dx], precision=prec))
        return out + b[None, :, None, None]

    def pool(x):
        hh, ww = x.shape[2], x.shape[3]
        ho, wo = hh - 2, ww - 2
        out = x[:, :, :ho, :wo]
        for dy in range(3):
            for dx in range(3):
                out = jnp.maximum(out, x[:, :, dy:dy + ho, dx:dx + wo])
        return out

    def c11(x, w, b):
        return (jnp.einsum("nchw,oc->nohw", x, w[:, :, 0, 0], precision=prec)
                + b[None, :, None, None])

    r = jax.nn.relu
    h = pool(r(conv(x, p["enc1_w"], p["enc1_b"])))
    h = pool(r(conv(h, p["enc2_w"], p["enc2_b"])))
    h = pool(r(conv(h, p["enc3_w"], p["enc3_b"])))
    h = r(c11(h, p["btl1_w"], p["btl1_b"]))
    h = r(c11(h, p["btl2_w"], p["btl2_b"]))
    h = r(c11(h, p["btl3_w"], p["btl3_b"]))
    for i in range(1, 7):
        h = r(conv_t(h, p[f"dec{i}_w"], p[f"dec{i}_b"]))
    return h


# ----------------------------------- main ------------------------------------
if __name__ == "__main__":
    key = jax.random.PRNGKey(0)
    k_x, k_p = jax.random.split(key)

    x = jax.random.normal(k_x, (2, 1, 16, 16), jnp.float32)   # NCHW, matches the module
    params = init_params(k_p)
    kparams = prepare_params(params, x.shape[0])

    out = ddae_forward(x, kparams)
    out = jax.block_until_ready(out)

    assert out.shape == (2, 1, 16, 16), out.shape
    assert out.dtype == jnp.float32
    assert bool(jnp.all(jnp.isfinite(out)))
    assert bool(jnp.all(out >= 0.0))            # final ReLU (dec_6 = relu(...))

    ref = jax.block_until_ready(jax.jit(_ref_forward)(x, params))
    assert bool(jnp.allclose(out, ref, atol=2e-3, rtol=2e-3)), \
        float(jnp.max(jnp.abs(out - ref)))

    print("KERNEL_OK")
</pallas_src>

<mosaic_0001>
module attributes {stable_mosaic.version = 11 : i64} {
  func.func @probe(%arg0: memref<8x128xf32, #tpu.memory_space<vmem>>, %arg1: memref<8x128xf32, #tpu.memory_space<vmem>>) attributes {dimension_semantics = [], scalar_prefetch = 0 : i64, scratch_operands = 0 : i64, tpu.core_type = #tpu.core_type<tc>} {
    %c0 = arith.constant 0 : index
    %c0_0 = arith.constant 0 : index
    %0 = vector.load %arg0[%c0, %c0_0] : memref<8x128xf32, #tpu.memory_space<vmem>>, vector<8x128xf32>
    %c1_i32 = arith.constant 1 : i32
    %1 = tpu.dynamic_rotate %0 by %c1_i32 dim 1 : vector<8x128xf32>, i32 -> vector<8x128xf32>
    %c0_1 = arith.constant 0 : index
    %c0_2 = arith.constant 0 : index
    %2 = vector.load %arg1[%c0_1, %c0_2] : memref<8x128xf32, #tpu.memory_space<vmem>>, vector<8x128xf32>
    tpu.vector_store %arg1[%c0_1, %c0_2], %1 {strides = array<i32>} : memref<8x128xf32, #tpu.memory_space<vmem>>, vector<8x128xf32>,
    return
  }
}

</mosaic_0001>

<llo_original>
// kernel: tpu_custom_call.1
$region0: #{tpu_custom_call.1}
  #allocation0 [shape = 'u32[]', space=smem, size = 0x4, offset = 0x4, fixed_abs, tag = 'smem constant byte address 0x4 - core index']
  #allocation1 [shape = 'u32[144,128]{1,0:T(1,128)}', space=vmem, size = 0x12000, scoped, tag = 'internal scratch']
  %s0 = inlined_call_operand.hbm [shape: f32[8,128], index: 0, kind: input, shape index: {}]
  %s1 = inlined_call_operand.hbm [shape: f32[8,128], index: 1, kind: output, shape index: {}]
  %s2 = sld [smem:[#allocation0]]
  $region18: #{tpu_custom_call.1} parent=0
    _
  %s4 = ssub.s32 1, %s2
  %s5 = scalar_select 0, %s4, %s2
  $region1: #{tpu_custom_call.1} parent=0
    #allocation2 [shape = 'u8[4096]{0}', space=vmem, size = 0x1000, scoped, tag = 'input window, operand 0, single buffered']
    #allocation3 [shape = 's32[1]{0}', space=sflag, size = 0x4, scoped, tag = 'scoped memory for tpu_custom_call.1']
    #allocation4 [shape = 's32[1]{0}', space=sflag, size = 0x4, scoped, tag = 'scoped memory for tpu_custom_call.1']
    #allocation5 [shape = 'u8[4096]{0}', space=vmem, size = 0x1000, scoped, tag = 'output window, operand 0, single buffered']
    %6 = vsyncpa [#allocation3], 0
    %7 = vsyncpa [#allocation4], 0
    // Predicated region
    $region2: #{tpu_custom_call.1} parent=1 // pred_check
      _
    $region3: #{tpu_custom_call.1} parent=1 // pred_check_branch
      %9 = sbr.rel (0) target = $region5
    $region4: #{tpu_custom_call.1} parent=1 // pred_region
      %s11 = ssub.s32 128, 128
      %12 = vsyncadd [#allocation3], %s11
      %s14 = sshll.u32 [#allocation2], 4
      %s15 = int_to_ptr.vmem [resolvable:$true] %s14
      %17 = dma.hbm_to_vmem [thread:$0]  %s0, 128, %s15, [#allocation3]
    $region5: #{tpu_custom_call.1} parent=1 // pred_fallthru
      _
    // Predicated region
    $region6: #{tpu_custom_call.1} parent=1 // pred_check
      _
    $region7: #{tpu_custom_call.1} parent=1 // pred_check_branch
      %19 = sbr.rel (0) target = $region9
    $region8: #{tpu_custom_call.1} parent=1 // pred_region
      %20 = dma.done [#allocation3], 128
    $region9: #{tpu_custom_call.1} parent=1 // pred_fallthru
      _
    %v21 = vld [vmem:[#allocation2] sm:$0xff]
    %22 = vrot.lane.b32.xlu0 %v21, 1
    %v23 = vpop.permute.xlu0 %22
    %24 = vst [vmem:[#allocation5] sm:$0xff] %v23
    // Predicated region
    $region10: #{tpu_custom_call.1} parent=1 // pred_check
      _
    $region11: #{tpu_custom_call.1} parent=1 // pred_check_branch
      %26 = sbr.rel (0) target = $region13
    $region12: #{tpu_custom_call.1} parent=1 // pred_region
      %s28 = ssub.s32 128, 128
      %29 = vsyncadd [#allocation4], %s28
      %s31 = sshll.u32 [#allocation5], 4
      %s32 = int_to_ptr.vmem [resolvable:$true] %s31
      %34 = dma.vmem_to_hbm [thread:$0]  %s32, 128, %s1, [#allocation4]
    $region13: #{tpu_custom_call.1} parent=1 // pred_fallthru
      _
    // Predicated region
    $region14: #{tpu_custom_call.1} parent=1 // pred_check
      _
    $region15: #{tpu_custom_call.1} parent=1 // pred_check_branch
      %36 = sbr.rel (0) target = $region17
    $region16: #{tpu_custom_call.1} parent=1 // pred_region
      %37 = dma.done [#allocation4], 128
    $region17: #{tpu_custom_call.1} parent=1 // pred_fallthru
      _
    %38 = vsyncpa [#allocation3], 1
    %39 = vsyncpa [#allocation4], 1

</llo_original>
